<compile_context>
chip_gen: v7x
topology: tpu7x:2x2x1
jax: 0.10.0
libtpu: 0.0.40
codegen_flags: <defaults>
</compile_context>

<pallas_src>
import functools

import jax
import jax.numpy as jnp
from jax.experimental import pallas as pl
from jax.experimental.pallas import tpu as pltpu


def _round_up(v, m):
    return (v + m - 1) // m * m


# ---------------------------------------------------------------------------
# Kernel 1: fused projection  h = x @ [W_l | W_r] + [0 | b_l]
# ---------------------------------------------------------------------------
def _project_kernel(x_ref, w_ref, b_ref, h_ref):
    h = jnp.dot(x_ref[...], w_ref[...], preferred_element_type=jnp.float32)
    h = h + b_ref[...]
    h_ref[...] = h.astype(h_ref.dtype)


# ---------------------------------------------------------------------------
# Kernel 2: tiled mean-aggregation + combine + activation
#   acc[i-tile] += A[i-tile, k-tile] @ h_l[k-tile]
#   finalize:  out = act(acc + h_r[i-tile])
# ---------------------------------------------------------------------------
def _aggregate_kernel(a_ref, hl_ref, hr_ref, o_ref, acc_ref, *, activation, f_out):
    k = pl.program_id(1)

    @pl.when(k == 0)
    def _init():
        acc_ref[...] = jnp.zeros_like(acc_ref)

    acc_ref[...] += jnp.dot(
        a_ref[...], hl_ref[...], preferred_element_type=jnp.float32
    )

    @pl.when(k == pl.num_programs(1) - 1)
    def _finalize():
        out = acc_ref[...] + hr_ref[...].astype(jnp.float32)
        if activation == "relu":
            out = jnp.maximum(out, 0.0)
        elif activation == "softmax":
            # mask padded lanes so they do not contribute to the softmax
            lane = jax.lax.broadcasted_iota(jnp.int32, out.shape, 1)
            out = jnp.where(lane < f_out, out, -1e30)
            m = jnp.max(out, axis=-1, keepdims=True)
            e = jnp.exp(out - m)
            out = e * pl.reciprocal(jnp.sum(e, axis=-1, keepdims=True), approx=True)
        o_ref[...] = out.astype(o_ref.dtype)


# ---------------------------------------------------------------------------
# One SAGEConv layer (padded / tiled)
# ---------------------------------------------------------------------------
def sage_conv_layer(a_pad, x_pad, w_l, w_r, b_l, activation, f_out):
    """a_pad: [N_pad, N_pad] bf16 row-normalized adjacency (zero padded)
    x_pad:   [N_pad, F_in_pad] f32 node features (zero padded)
    w_l/w_r: [f_in, f_out] f32, b_l: [f_out] f32
    Returns  [N_pad, F_out_pad] f32 with activation applied."""
    n_pad, f_in_pad = x_pad.shape
    f_in = w_l.shape[0]
    f_out_pad = _round_up(f_out, 128)

    # Fused, lane-padded weight/bias:  W_cat = [W_l | W_r], bias on the root half.
    w_cat = jnp.zeros((f_in_pad, 2 * f_out_pad), jnp.float32)
    w_cat = w_cat.at[:f_in, :f_out].set(w_l)
    w_cat = w_cat.at[:f_in, f_out_pad:f_out_pad + f_out].set(w_r)
    b_cat = jnp.zeros((1, 2 * f_out_pad), jnp.float32)
    b_cat = b_cat.at[0, f_out_pad:f_out_pad + f_out].set(b_l)

    # Tile sizes (N_pad is always a multiple of 128); sized well inside the
    # 32 MiB scoped VMEM default so the same config is safe on v5e/v6e/v7x.
    tm = 256 if n_pad % 256 == 0 else 128
    tk = 512 if n_pad % 512 == 0 else (256 if n_pad % 256 == 0 else 128)

    cparams = pltpu.CompilerParams(
        dimension_semantics=("parallel",),
        vmem_limit_bytes=32 * 1024 * 1024,
    )

    # --- projection: h = x @ W_cat + b_cat  (bf16 output to halve HBM traffic)
    h = pl.pallas_call(
        _project_kernel,
        out_shape=jax.ShapeDtypeStruct((n_pad, 2 * f_out_pad), jnp.bfloat16),
        grid=(n_pad // tm,),
        in_specs=[
            pl.BlockSpec((tm, f_in_pad), lambda i: (i, 0)),
            pl.BlockSpec((f_in_pad, 2 * f_out_pad), lambda i: (0, 0)),
            pl.BlockSpec((1, 2 * f_out_pad), lambda i: (0, 0)),
        ],
        out_specs=pl.BlockSpec((tm, 2 * f_out_pad), lambda i: (i, 0)),
        compiler_params=cparams,
    )(x_pad, w_cat, b_cat)

    # --- aggregation: out = A @ h_l + h_r  (+ activation), tiled over rows x K.
    # h is passed twice; BlockSpec column-block index selects the two halves.
    kernel = functools.partial(_aggregate_kernel, activation=activation, f_out=f_out)
    out = pl.pallas_call(
        kernel,
        out_shape=jax.ShapeDtypeStruct((n_pad, f_out_pad), jnp.float32),
        grid=(n_pad // tm, n_pad // tk),
        in_specs=[
            pl.BlockSpec((tm, tk), lambda i, k: (i, k)),            # A tile
            pl.BlockSpec((tk, f_out_pad), lambda i, k: (k, 0)),     # h_l (left half)
            pl.BlockSpec((tm, f_out_pad), lambda i, k: (i, 1)),     # h_r (right half)
        ],
        out_specs=pl.BlockSpec((tm, f_out_pad), lambda i, k: (i, 0)),
        scratch_shapes=[pltpu.VMEM((tm, f_out_pad), jnp.float32)],
        compiler_params=pltpu.CompilerParams(
            dimension_semantics=("parallel", "arbitrary"),
            vmem_limit_bytes=32 * 1024 * 1024,
        ),
    )(a_pad, h, h)
    return out


# ---------------------------------------------------------------------------
# Glue: dense normalized adjacency, parameter init, forward
# ---------------------------------------------------------------------------
def build_mean_adjacency(edge_index, num_nodes):
    """A[i, j] = 1/deg_in(i) for each edge j -> i (PyG scatter-mean semantics;
    duplicate edges counted multiply, matching scatter-mean on a multigraph)."""
    src = edge_index[0]
    dst = edge_index[1]
    a = jnp.zeros((num_nodes, num_nodes), jnp.float32)
    a = a.at[dst, src].add(1.0)
    deg = jnp.maximum(jnp.sum(a, axis=1, keepdims=True), 1.0)
    return a / deg


def init_sage_params(key, in_channels, hidden_channels, out_channels, num_layers):
    dims = [in_channels] + [hidden_channels] * (num_layers - 1) + [out_channels]
    params = []
    for li in range(num_layers):
        f_in, f_out = dims[li], dims[li + 1]
        key, k1, k2, k3 = jax.random.split(key, 4)
        limit = (6.0 / (f_in + f_out)) ** 0.5
        w_l = jax.random.uniform(k1, (f_in, f_out), jnp.float32, -limit, limit)
        w_r = jax.random.uniform(k2, (f_in, f_out), jnp.float32, -limit, limit)
        b_l = jax.random.uniform(k3, (f_out,), jnp.float32, -0.1, 0.1)
        params.append((w_l, w_r, b_l))
    return params


def sage_forward(params, x, edge_index):
    num_nodes, in_channels = x.shape
    n_pad = _round_up(num_nodes, 128)

    # bf16 adjacency: halves the O(N^2) HBM stream and uses the bf16 MXU path.
    a = build_mean_adjacency(edge_index, num_nodes)
    a_pad = jnp.zeros((n_pad, n_pad), jnp.bfloat16)
    a_pad = a_pad.at[:num_nodes, :num_nodes].set(a.astype(jnp.bfloat16))

    f_in_pad = _round_up(in_channels, 128)
    h = jnp.zeros((n_pad, f_in_pad), jnp.float32)
    h = h.at[:num_nodes, :in_channels].set(x)

    num_layers = len(params)
    f_out_last = params[-1][0].shape[1]
    for li, (w_l, w_r, b_l) in enumerate(params):
        # F.dropout(..., training=False) is the identity at inference.
        activation = "softmax" if li == num_layers - 1 else "relu"
        h = sage_conv_layer(a_pad, h, w_l, w_r, b_l, activation, w_l.shape[1])
    return h[:num_nodes, :f_out_last]


# ---------------------------------------------------------------------------
# Pure-JAX f32 reference
# ---------------------------------------------------------------------------
def sage_forward_ref(params, x, edge_index):
    a = build_mean_adjacency(edge_index, x.shape[0])
    num_layers = len(params)
    h = x
    for li, (w_l, w_r, b_l) in enumerate(params):
        out = (a @ h) @ w_l + h @ w_r + b_l
        h = jax.nn.softmax(out, axis=-1) if li == num_layers - 1 else jax.nn.relu(out)
    return h


if __name__ == "__main__":
    key = jax.random.PRNGKey(0)

    # Small synthetic graph consistent with the module's forward signature.
    num_nodes = 16
    num_edges = 48
    in_channels = 8
    hidden_channels = 64
    out_channels = 4
    num_layers = 2

    key, kx, ke_src, ke_dst, kp = jax.random.split(key, 5)
    x = jax.random.normal(kx, (num_nodes, in_channels), jnp.float32)
    src = jax.random.randint(ke_src, (num_edges,), 0, num_nodes, jnp.int32)
    dst = jax.random.randint(ke_dst, (num_edges,), 0, num_nodes, jnp.int32)
    edge_index = jnp.stack([src, dst], axis=0)  # [2, E]

    params = init_sage_params(kp, in_channels, hidden_channels, out_channels, num_layers)

    out = jax.block_until_ready(sage_forward(params, x, edge_index))
    ref = jax.block_until_ready(sage_forward_ref(params, x, edge_index))

    assert out.shape == (num_nodes, out_channels)
    # bf16 adjacency / projections + approx reciprocal -> looser tolerance vs f32 ref.
    assert jnp.allclose(out, ref, atol=3e-2, rtol=3e-2), "mismatch vs JAX reference"
    assert jnp.allclose(jnp.sum(out, axis=-1), 1.0, atol=1e-2)

    print("KERNEL_OK")
</pallas_src>

<mosaic_0001>
module attributes {stable_mosaic.version = 11 : i64} {
  func.func @_project_kernel(%arg0: i32, %arg1: memref<128x128xf32, #tpu.memory_space<vmem>>, %arg2: memref<128x256xf32, #tpu.memory_space<vmem>>, %arg3: memref<1x256xf32, #tpu.memory_space<vmem>>, %arg4: memref<128x256xbf16, #tpu.memory_space<vmem>>) attributes {dimension_semantics = [#tpu.dimension_semantics<parallel>], iteration_bounds = array<i64: 1>, scalar_prefetch = 0 : i64, scratch_operands = 0 : i64, tpu.core_type = #tpu.core_type<tc>, window_params = [{transform_indices = @transform_0, window_bounds = array<i64: 128, 128>}, {pipeline_mode = #tpu.pipeline_mode<synchronous>, transform_indices = @transform_1, window_bounds = array<i64: 128, 256>}, {pipeline_mode = #tpu.pipeline_mode<synchronous>, transform_indices = @transform_2, window_bounds = array<i64: 1, 256>}, {transform_indices = @transform_3, window_bounds = array<i64: 128, 256>}]} {
    %c0 = arith.constant 0 : index
    %c0_0 = arith.constant 0 : index
    %0 = vector.load %arg1[%c0, %c0_0] : memref<128x128xf32, #tpu.memory_space<vmem>>, vector<128x128xf32>
    %c0_1 = arith.constant 0 : index
    %c0_2 = arith.constant 0 : index
    %1 = vector.load %arg2[%c0_1, %c0_2] : memref<128x256xf32, #tpu.memory_space<vmem>>, vector<128x256xf32>
    %cst = arith.constant dense<0.000000e+00> : vector<128x256xf32>
    %2 = tpu.matmul %0, %1, %cst {dimension_numbers = #tpu.dot_dimension_numbers<[1], [0], [0], [1], [0, 0, 1, 1], [], []>} : vector<128x128xf32>, vector<128x256xf32>, vector<128x256xf32> -> vector<128x256xf32>
    %c0_3 = arith.constant 0 : index
    %c0_4 = arith.constant 0 : index
    %3 = vector.load %arg3[%c0_3, %c0_4] : memref<1x256xf32, #tpu.memory_space<vmem>>, vector<1x256xf32>
    %4 = vector.broadcast %3 : vector<1x256xf32> to vector<128x256xf32>
    %5 = arith.addf %2, %4 : vector<128x256xf32>
    %6 = arith.truncf %5 : vector<128x256xf32> to vector<128x256xbf16>
    %c0_5 = arith.constant 0 : index
    %c0_6 = arith.constant 0 : index
    %7 = vector.load %arg4[%c0_5, %c0_6] : memref<128x256xbf16, #tpu.memory_space<vmem>>, vector<128x256xbf16>
    tpu.vector_store %arg4[%c0_5, %c0_6], %6 {strides = array<i32>} : memref<128x256xbf16, #tpu.memory_space<vmem>>, vector<128x256xbf16>,
    return
  }
  func.func @transform_0(%arg0: i32) -> (i32, i32) {
    %c0_i32 = arith.constant 0 : i32
    %c0_i32_0 = arith.constant 0 : i32
    return %arg0, %c0_i32 : i32, i32
  }
  func.func @transform_1(%arg0: i32) -> (i32, i32) {
    %c0_i32 = arith.constant 0 : i32
    %c0_i32_0 = arith.constant 0 : i32
    %c0_i32_1 = arith.constant 0 : i32
    return %c0_i32, %c0_i32_0 : i32, i32
  }
  func.func @transform_2(%arg0: i32) -> (i32, i32) {
    %c0_i32 = arith.constant 0 : i32
    %c0_i32_0 = arith.constant 0 : i32
    %c0_i32_1 = arith.constant 0 : i32
    return %c0_i32, %c0_i32_0 : i32, i32
  }
  func.func @transform_3(%arg0: i32) -> (i32, i32) {
    %c0_i32 = arith.constant 0 : i32
    %c0_i32_0 = arith.constant 0 : i32
    return %arg0, %c0_i32 : i32, i32
  }
}

</mosaic_0001>

<llo_original>
// kernel: tpu_custom_call.1
$region0: #{tpu_custom_call.1}
  #allocation0 [shape = 'u32[]', space=smem, size = 0x4, offset = 0x4, fixed_abs, tag = 'smem constant byte address 0x4 - core index']
  #allocation1 [shape = 'u32[144,128]{1,0:T(1,128)}', space=vmem, size = 0x12000, scoped, tag = 'internal scratch']
  %s0 = inlined_call_operand.hbm [shape: f32[128,128], index: 0, kind: input, shape index: {}]
  %s1 = inlined_call_operand.hbm [shape: f32[128,256], index: 1, kind: input, shape index: {}]
  %s2 = inlined_call_operand.vmem [shape: f32[1,256], index: 2, kind: input, shape index: {}]
  %s3 = inlined_call_operand.hbm [shape: bf16[128,256], index: 3, kind: output, shape index: {}]
  %s4 = sld [smem:[#allocation0]]
  $region30: #{tpu_custom_call.1} parent=0
    _
  %s6 = ssub.s32 1, %s4
  %s7 = scalar_select 0, %s6, %s4
  $region1: #{tpu_custom_call.1} parent=0
    #allocation2 [shape = 'u8[65536]{0}', space=vmem, size = 0x10000, scoped, tag = 'input window, operand 0, single buffered']
    #allocation3 [shape = 's32[1]{0}', space=sflag, size = 0x4, scoped, tag = 'scoped memory for tpu_custom_call.1']
    #allocation4 [shape = 's32[1]{0}', space=sflag, size = 0x4, scoped, tag = 'scoped memory for tpu_custom_call.1']
    #allocation5 [shape = 'u8[131072]{0}', space=vmem, size = 0x20000, scoped, tag = 'input window, operand 1, single buffered']
    #allocation6 [shape = 's32[1]{0}', space=sflag, size = 0x4, scoped, tag = 'scoped memory for tpu_custom_call.1']
    #allocation7 [shape = 'u8[65536]{0}', space=vmem, size = 0x10000, scoped, tag = 'output window, operand 0, single buffered']
    %8 = vsyncpa [#allocation3], 0
    %9 = vsyncpa [#allocation6], 0
    %10 = vsyncpa [#allocation4], 0
    // Predicated region
    $region2: #{tpu_custom_call.1} parent=1 // pred_check
      _
    $region3: #{tpu_custom_call.1} parent=1 // pred_check_branch
      %12 = sbr.rel (0) target = $region5
    $region4: #{tpu_custom_call.1} parent=1 // pred_region
      %s14 = ssub.s32 2048, 2048
      %15 = vsyncadd [#allocation3], %s14
      %s16 = sshll.u32 [#allocation2], 4
      %s17 = int_to_ptr.vmem [resolvable:$true] %s16
      %22 = dma.hbm_to_vmem [thread:$0]  %s0, 2048, %s17, [#allocation3], 128, 128, 8
    $region5: #{tpu_custom_call.1} parent=1 // pred_fallthru
      _
    // Predicated region
    $region6: #{tpu_custom_call.1} parent=1 // pred_check
      _
    $region7: #{tpu_custom_call.1} parent=1 // pred_check_branch
      %24 = sbr.rel (0) target = $region9
    $region8: #{tpu_custom_call.1} parent=1 // pred_region
      %s26 = ssub.s32 4096, 4096
      %27 = vsyncadd [#allocation6], %s26
      %s28 = sshll.u32 [#allocation5], 4
      %s29 = int_to_ptr.vmem [resolvable:$true] %s28
      %34 = dma.hbm_to_vmem [thread:$0]  %s1, 4096, %s29, [#allocation6], 256, 256, 16
    $region9: #{tpu_custom_call.1} parent=1 // pred_fallthru
      _
    // Predicated region
    $region10: #{tpu_custom_call.1} parent=1 // pred_check
      _
    $region11: #{tpu_custom_call.1} parent=1 // pred_check_branch
      %36 = sbr.rel (0) target = $region13
    $region12: #{tpu_custom_call.1} parent=1 // pred_region
      _
    $region13: #{tpu_custom_call.1} parent=1 // pred_fallthru
      _
    // Predicated region
    $region14: #{tpu_custom_call.1} parent=1 // pred_check
      _
    $region15: #{tpu_custom_call.1} parent=1 // pred_check_branch
      %38 = sbr.rel (0) target = $region17
    $region16: #{tpu_custom_call.1} parent=1 // pred_region
      %39 = dma.done [#allocation3], 2048
    $region17: #{tpu_custom_call.1} parent=1 // pred_fallthru
      _
    // Predicated region
    $region18: #{tpu_custom_call.1} parent=1 // pred_check
      _
    $region19: #{tpu_custom_call.1} parent=1 // pred_check_branch
      %41 = sbr.rel (0) target = $region21
    $region20: #{tpu_custom_call.1} parent=1 // pred_region
      %42 = dma.done [#allocation6], 4096
    $region21: #{tpu_custom_call.1} parent=1 // pred_fallthru
      _
    %v43 = vld [vmem:[#allocation2] sm:$0xff]
    %v44 = vld [vmem:[#allocation2 + $0x8] sm:$0xff]
    %v45 = vld [vmem:[#allocation2 + $0x10] sm:$0xff]
    %v46 = vld [vmem:[#allocation2 + $0x18] sm:$0xff]
    %v47 = vld [vmem:[#allocation2 + $0x20] sm:$0xff]
    %v48 = vld [vmem:[#allocation2 + $0x28] sm:$0xff]
    %v49 = vld [vmem:[#allocation2 + $0x30] sm:$0xff]
    %v50 = vld [vmem:[#allocation2 + $0x38] sm:$0xff]
    %v51 = vld [vmem:[#allocation2 + $0x40] sm:$0xff]
    %v52 = vld [vmem:[#allocation2 + $0x48] sm:$0xff]
    %v53 = vld [vmem:[#allocation2 + $0x50] sm:$0xff]
    %v54 = vld [vmem:[#allocation2 + $0x58] sm:$0xff]
    %v55 = vld [vmem:[#allocation2 + $0x60] sm:$0xff]
    %v56 = vld [vmem:[#allocation2 + $0x68] sm:$0xff]
    %v57 = vld [vmem:[#allocation2 + $0x70] sm:$0xff]
    %v58 = vld [vmem:[#allocation2 + $0x78] sm:$0xff]
    %v59 = vld [vmem:[#allocation5] sm:$0xff]
    %v60 = vld [vmem:[#allocation5 + $0x8] sm:$0xff]
    %v61 = vld [vmem:[#allocation5 + $0x10] sm:$0xff]
    %v62 = vld [vmem:[#allocation5 + $0x18] sm:$0xff]
    %v63 = vld [vmem:[#allocation5 + $0x20] sm:$0xff]
    %v64 = vld [vmem:[#allocation5 + $0x28] sm:$0xff]
    %v65 = vld [vmem:[#allocation5 + $0x30] sm:$0xff]
    %v66 = vld [vmem:[#allocation5 + $0x38] sm:$0xff]
    %v67 = vld [vmem:[#allocation5 + $0x40] sm:$0xff]
    %v68 = vld [vmem:[#allocation5 + $0x48] sm:$0xff]
    %v69 = vld [vmem:[#allocation5 + $0x50] sm:$0xff]
    %v70 = vld [vmem:[#allocation5 + $0x58] sm:$0xff]
    %v71 = vld [vmem:[#allocation5 + $0x60] sm:$0xff]
    %v72 = vld [vmem:[#allocation5 + $0x68] sm:$0xff]
    %v73 = vld [vmem:[#allocation5 + $0x70] sm:$0xff]
    %v74 = vld [vmem:[#allocation5 + $0x78] sm:$0xff]
    %v75 = vld [vmem:[#allocation5 + $0x80] sm:$0xff]
    %v76 = vld [vmem:[#allocation5 + $0x88] sm:$0xff]
    %v77 = vld [vmem:[#allocation5 + $0x90] sm:$0xff]
    %v78 = vld [vmem:[#allocation5 + $0x98] sm:$0xff]
    %v79 = vld [vmem:[#allocation5 + $0xa0] sm:$0xff]
    %v80 = vld [vmem:[#allocation5 + $0xa8] sm:$0xff]
    %v81 = vld [vmem:[#allocation5 + $0xb0] sm:$0xff]
    %v82 = vld [vmem:[#allocation5 + $0xb8] sm:$0xff]
    %v83 = vld [vmem:[#allocation5 + $0xc0] sm:$0xff]
    %v84 = vld [vmem:[#allocation5 + $0xc8] sm:$0xff]
    %v85 = vld [vmem:[#allocation5 + $0xd0] sm:$0xff]
    %v86 = vld [vmem:[#allocation5 + $0xd8] sm:$0xff]
    %v87 = vld [vmem:[#allocation5 + $0xe0] sm:$0xff]
    %v88 = vld [vmem:[#allocation5 + $0xe8] sm:$0xff]
    %v89 = vld [vmem:[#allocation5 + $0xf0] sm:$0xff]
    %v90 = vld [vmem:[#allocation5 + $0xf8] sm:$0xff]
    %v91 = vld [vmem:[%s2] sm:$0x3]
    %v93 = vlaneseq
    %v94 = vshrl.u32 %v93, 7
    %v95 = vsub.s32 0, %v94
    %v96 = vrot.slane %v91, %v95
    %v97 = vlaneseq
    %v98 = vshrl.u32 %v97, 7
    %v99 = vsub.s32 1, %v98
    %v100 = vrot.slane %v91, %v99
    %103 = vmatprep.subr.mxu0 %v60
    %104 = vmatpush1.msra.mxu0 %v59
    %105 = vmatprep.subr.mxu0 %v62
    %106 = vmatpush1.msra.mxu0 %v61
    %107 = vmatprep.subr.mxu0 %v64
    %108 = vmatpush1.msra.mxu0 %v63
    %109 = vmatprep.subr.mxu0 %v66
    %110 = vmatpush1.msra.mxu0 %v65
    %111 = vmatprep.subr.mxu0 %v68
    %112 = vmatpush1.msra.mxu0 %v67
    %113 = vmatprep.subr.mxu0 %v70
    %114 = vmatpush1.msra.mxu0 %v69
    %115 = vmatprep.subr.mxu0 %v72
    %116 = vmatpush1.msra.mxu0 %v71
    %117 = vmatprep.subr.mxu0 %v74
    %118 = vmatpush1.msra.mxu0 %v73
    %119 = vmatprep.subr.mxu0 %v76
    %120 = vmatpush1.msra.mxu0 %v75
    %121 = vmatprep.subr.mxu0 %v78
    %122 = vmatpush1.msra.mxu0 %v77
    %123 = vmatprep.subr.mxu0 %v80
    %124 = vmatpush1.msra.mxu0 %v79
    %125 = vmatprep.subr.mxu0 %v82
    %126 = vmatpush1.msra.mxu0 %v81
    %127 = vmatprep.subr.mxu0 %v84
    %128 = vmatpush1.msra.mxu0 %v83
    %129 = vmatprep.subr.mxu0 %v86
    %130 = vmatpush1.msra.mxu0 %v85
    %131 = vmatprep.subr.mxu0 %v88
    %132 = vmatpush1.msra.mxu0 %v87
    %133 = vmatprep.subr.mxu0 %v90
    %134 = vmatpush1.msra.mxu0 %v89
    %135 = vmatprep.subr.mxu0 0.0
    %136 = vmatpush1.msra.mxu0 0.0
    %137 = vmatprep.subr.mxu0 0.0
    %138 = vmatpush1.msra.mxu0 0.0
    %139 = vmatprep.subr.mxu0 0.0
    %140 = vmatpush1.msra.mxu0 0.0
    %141 = vmatprep.subr.mxu0 0.0
    %142 = vmatpush1.msra.mxu0 0.0
    %143 = vmatprep.subr.mxu0 0.0
    %144 = vmatpush1.msra.mxu0 0.0
    %145 = vmatprep.subr.mxu0 0.0
    %146 = vmatpush1.msra.mxu0 0.0
    %147 = vmatprep.subr.mxu0 0.0
    %148 = vmatpush1.msra.mxu0 0.0
    %149 = vmatprep.subr.mxu0 0.0
    %150 = vmatpush1.msra.mxu0 0.0
    %151 = vmatprep.subr.mxu0 0.0
    %152 = vmatpush1.msra.mxu0 0.0
    %153 = vmatprep.subr.mxu0 0.0
    %154 = vmatpush1.msra.mxu0 0.0
    %155 = vmatprep.subr.mxu0 0.0
    %156 = vmatpush1.msra.mxu0 0.0
    %157 = vmatprep.subr.mxu0 0.0
    %158 = vmatpush1.msra.mxu0 0.0
    %159 = vmatprep.subr.mxu0 0.0
    %160 = vmatpush1.msra.mxu0 0.0
    %161 = vmatprep.subr.mxu0 0.0
    %162 = vmatpush1.msra.mxu0 0.0
    %163 = vmatprep.subr.mxu0 0.0
    %164 = vmatpush1.msra.mxu0 0.0
    %165 = vmatprep.subr.mxu0 0.0
    %166 = vmatpush1.msra.mxu0 0.0
    %167 = vmatprep.mubr.f32.mxu0 0.0
    %168 = vmatmul.mubr.f32.gmra.mrb[0].mxu0 %v43
    %v169 = vpop.f32.mrb[0].mxu0
    %v170 = vadd.f32 %v96, %v169
    %v171 = vpop.f32.mrb[0].mxu0
    %v172 = vadd.f32 %v100, %v171
    %173 = vmatprep.mubr.f32.mxu0 0.0
    %174 = vmatmul.mubr.f32.gmra.mrb[0].mxu0 %v44
    %v175 = vpop.f32.mrb[0].mxu0
    %v176 = vadd.f32 %v96, %v175
    %v177 = vpop.f32.mrb[0].mxu0
    %v178 = vadd.f32 %v100, %v177
    %179 = vmatprep.mubr.f32.mxu0 0.0
    %180 = vmatmul.mubr.f32.gmra.mrb[0].mxu0 %v45
    %v181 = vpop.f32.mrb[0].mxu0
    %v182 = vadd.f32 %v96, %v181
    %v183 = vpop.f32.mrb[0].mxu0
    %v184 = vadd.f32 %v100, %v183
    %185 = vmatprep.mubr.f32.mxu0 0.0
    %186 = vmatmul.mubr.f32.gmra.mrb[0].mxu0 %v46
    %v187 = vpop.f32.mrb[0].mxu0
    %v188 = vadd.f32 %v96, %v187
    %v189 = vpop.f32.mrb[0].mxu0
    %v190 = vadd.f32 %v100, %v189
    %191 = vmatprep.mubr.f32.mxu0 0.0
    %192 = vmatmul.mubr.f32.gmra.mrb[0].mxu0 %v47
    %v193 = vpop.f32.mrb[0].mxu0
    %v194 = vadd.f32 %v96, %v193
    %v195 = vpop.f32.mrb[0].mxu0
    %v196 = vadd.f32 %v100, %v195
    %197 = vmatprep.mubr.f32.mxu0 0.0
    %198 = vmatmul.mubr.f32.gmra.mrb[0].mxu0 %v48
    %v199 = vpop.f32.mrb[0].mxu0
    %v200 = vadd.f32 %v96, %v199
    %v201 = vpop.f32.mrb[0].mxu0
    %v202 = vadd.f32 %v100, %v201
    %203 = vmatprep.mubr.f32.mxu0 0.0
    %204 = vmatmul.mubr.f32.gmra.mrb[0].mxu0 %v49
    %v205 = vpop.f32.mrb[0].mxu0
    %v206 = vadd.f32 %v96, %v205
    %v207 = vpop.f32.mrb[0].mxu0
    %v208 = vadd.f32 %v100, %v207
    %209 = vmatprep.mubr.f32.mxu0 0.0
    %210 = vmatmul.mubr.f32.gmra.mrb[0].mxu0 %v50
    %v211 = vpop.f32.mrb[0].mxu0
    %v212 = vadd.f32 %v96, %v211
    %v213 = vpop.f32.mrb[0].mxu0
    %v214 = vadd.f32 %v100, %v213
    %215 = vmatprep.mubr.f32.mxu0 0.0
    %216 = vmatmul.mubr.f32.gmra.mrb[0].mxu0 %v51
    %v217 = vpop.f32.mrb[0].mxu0
    %v218 = vadd.f32 %v96, %v217
    %v219 = vpop.f32.mrb[0].mxu0
    %v220 = vadd.f32 %v100, %v219
    %221 = vmatprep.mubr.f32.mxu0 0.0
    %222 = vmatmul.mubr.f32.gmra.mrb[0].mxu0 %v52
    %v223 = vpop.f32.mrb[0].mxu0
    %v224 = vadd.f32 %v96, %v223
    %v225 = vpop.f32.mrb[0].mxu0
    %v226 = vadd.f32 %v100, %v225
    %227 = vmatprep.mubr.f32.mxu0 0.0
    %228 = vmatmul.mubr.f32.gmra.mrb[0].mxu0 %v53
    %v229 = vpop.f32.mrb[0].mxu0
    %v230 = vadd.f32 %v96, %v229
    %v231 = vpop.f32.mrb[0].mxu0
    %v232 = vadd.f32 %v100, %v231
    %233 = vmatprep.mubr.f32.mxu0 0.0
    %234 = vmatmul.mubr.f32.gmra.mrb[0].mxu0 %v54
    %v235 = vpop.f32.mrb[0].mxu0
    %v236 = vadd.f32 %v96, %v235
    %v237 = vpop.f32.mrb[0].mxu0
    %v238 = vadd.f32 %v100, %v237
    %239 = vmatprep.mubr.f32.mxu0 0.0
    %240 = vmatmul.mubr.f32.gmra.mrb[0].mxu0 %v55
    %v241 = vpop.f32.mrb[0].mxu0
    %v242 = vadd.f32 %v96, %v241
    %v243 = vpop.f32.mrb[0].mxu0
    %v244 = vadd.f32 %v100, %v243
    %245 = vmatprep.mubr.f32.mxu0 0.0
    %246 = vmatmul.mubr.f32.gmra.mrb[0].mxu0 %v56
    %v247 = vpop.f32.mrb[0].mxu0
    %v248 = vadd.f32 %v96, %v247
    %v249 = vpop.f32.mrb[0].mxu0
    %v250 = vadd.f32 %v100, %v249
    %251 = vmatprep.mubr.f32.mxu0 0.0
    %252 = vmatmul.mubr.f32.gmra.mrb[0].mxu0 %v57
    %v253 = vpop.f32.mrb[0].mxu0
    %v254 = vadd.f32 %v96, %v253
    %v255 = vpop.f32.mrb[0].mxu0
    %v256 = vadd.f32 %v100, %v255
    %257 = vmatprep.mubr.f32.mxu0 0.0
    %258 = vmatmul.mubr.f32.gmra.mrb[0].mxu0 %v58
    %v259 = vpop.f32.mrb[0].mxu0
    %v260 = vadd.f32 %v96, %v259
    %v261 = vpop.f32.mrb[0].mxu0
    %v262 = vadd.f32 %v100, %v261
    %263 = vdwg.mxu0
    %v264 = vpack.c.bf16 %v176, %v170
    %v265 = vpack.c.bf16 %v178, %v172
    %v266 = vpack.c.bf16 %v188, %v182
    %v267 = vpack.c.bf16 %v190, %v184
    %v268 = vpack.c.bf16 %v200, %v194
    %v269 = vpack.c.bf16 %v202, %v196
    %v270 = vpack.c.bf16 %v212, %v206
    %v271 = vpack.c.bf16 %v214, %v208
    %v272 = vpack.c.bf16 %v224, %v218
    %v273 = vpack.c.bf16 %v226, %v220
    %v274 = vpack.c.bf16 %v236, %v230
    %v275 = vpack.c.bf16 %v238, %v232
    %v276 = vpack.c.bf16 %v248, %v242
    %v277 = vpack.c.bf16 %v250, %v244
    %v278 = vpack.c.bf16 %v260, %v254
    %v279 = vpack.c.bf16 %v262, %v256
    %v296 = vunpack.c.l.b16 %v264
    %v297 = vunpack.c.l.b16 %v265
    %v298 = vunpack.c.h.b16 %v264
    %v299 = vunpack.c.h.b16 %v265
    %v300 = vunpack.c.l.b16 %v266
    %v301 = vunpack.c.l.b16 %v267
    %v302 = vunpack.c.h.b16 %v266
    %v303 = vunpack.c.h.b16 %v267
    %v304 = vunpack.c.l.b16 %v268
    %v305 = vunpack.c.l.b16 %v269
    %v306 = vunpack.c.h.b16 %v268
    %v307 = vunpack.c.h.b16 %v269
    %v308 = vunpack.c.l.b16 %v270
    %v309 = vunpack.c.l.b16 %v271
    %v310 = vunpack.c.h.b16 %v270
    %v311 = vunpack.c.h.b16 %v271
    %v312 = vunpack.c.l.b16 %v272
    %v313 = vunpack.c.l.b16 %v273
    %v314 = vunpack.c.h.b16 %v272
    %v315 = vunpack.c.h.b16 %v273
    %v316 = vunpack.c.l.b16 %v274
    %v317 = vunpack.c.l.b16 %v275
    %v318 = vunpack.c.h.b16 %v274
    %v319 = vunpack.c.h.b16 %v275
    %v320 = vunpack.c.l.b16 %v276
    %v321 = vunpack.c.l.b16 %v277
    %v322 = vunpack.c.h.b16 %v276
    %v323 = vunpack.c.h.b16 %v277
    %v324 = vunpack.c.l.b16 %v278
    %v325 = vunpack.c.l.b16 %v279
    %v326 = vunpack.c.h.b16 %v278
    %v327 = vunpack.c.h.b16 %v279
    %v328 = vpack.c.b16 %v297, %v296
    %v329 = vpack.c.b16 %v299, %v298
    %v330 = vpack.c.b16 %v301, %v300
    %v331 = vpack.c.b16 %v303, %v302
    %v332 = vpack.c.b16 %v305, %v304
    %v333 = vpack.c.b16 %v307, %v306
    %v334 = vpack.c.b16 %v309, %v308
    %v335 = vpack.c.b16 %v311, %v310
    %v336 = vpack.c.b16 %v313, %v312
    %v337 = vpack.c.b16 %v315, %v314
    %v338 = vpack.c.b16 %v317, %v316
    %v339 = vpack.c.b16 %v319, %v318
    %v340 = vpack.c.b16 %v321, %v320
    %v341 = vpack.c.b16 %v323, %v322
    %v342 = vpack.c.b16 %v325, %v324
    %v343 = vpack.c.b16 %v327, %v326
    %360 = vst [vmem:[#allocation7] sm:$0xff] %v328
    %361 = vst [vmem:[#allocation7 + $0x8] sm:$0xff] %v329
    %362 = vst [vmem:[#allocation7 + $0x10] sm:$0xff] %v330
    %363 = vst [vmem:[#allocation7 + $0x18] sm:$0xff] %v331
    %364 = vst [vmem:[#allocation7 + $0x20] sm:$0xff] %v332
    %365 = vst [vmem:[#allocation7 + $0x28] sm:$0xff] %v333
    %366 = vst [vmem:[#allocation7 + $0x30] sm:$0xff] %v334
    %367 = vst [vmem:[#allocation7 + $0x38] sm:$0xff] %v335
    %368 = vst [vmem:[#allocation7 + $0x40] sm:$0xff] %v336
    %369 = vst [vmem:[#allocation7 + $0x48] sm:$0xff] %v337
    %370 = vst [vmem:[#allocation7 + $0x50] sm:$0xff] %v338
    %371 = vst [vmem:[#allocation7 + $0x58] sm:$0xff] %v339
    %372 = vst [vmem:[#allocation7 + $0x60] sm:$0xff] %v340
    %373 = vst [vmem:[#allocation7 + $0x68] sm:$0xff] %v341
    %374 = vst [vmem:[#allocation7 + $0x70] sm:$0xff] %v342
    %375 = vst [vmem:[#allocation7 + $0x78] sm:$0xff] %v343
    // Predicated region
    $region22: #{tpu_custom_call.1} parent=1 // pred_check
      _
    $region23: #{tpu_custom_call.1} parent=1 // pred_check_branch
      %377 = sbr.rel (0) target = $region25
    $region24: #{tpu_custom_call.1} parent=1 // pred_region
      %s379 = ssub.s32 2048, 2048
      %380 = vsyncadd [#allocation4], %s379
      %s381 = sshll.u32 [#allocation7], 4
      %s382 = int_to_ptr.vmem [resolvable:$true] %s381
      %387 = dma.vmem_to_hbm [thread:$0]  %s382, 2048, %s3, [#allocation4], 128, 128, 8
    $region25: #{tpu_custom_call.1} parent=1 // pred_fallthru
      _
    // Predicated region
    $region26: #{tpu_custom_call.1} parent=1 // pred_check
      _
    $region27: #{tpu_custom_call.1} parent=1 // pred_check_branch
      %389 = sbr.rel (0) target = $region29
    $region28: #{tpu_custom_call.1} parent=1 // pred_region
      %390 = dma.done [#allocation4], 2048
    $region29: #{tpu_custom_call.1} parent=1 // pred_fallthru
      _
    %391 = vsyncpa [#allocation3], 1
    %392 = vsyncpa [#allocation6], 1
    %393 = vsyncpa [#allocation4], 1

</llo_original>
